<compile_context>
chip_gen: v7x
topology: tpu7x:2x2x1
jax: 0.10.0
libtpu: 0.0.40
codegen_flags: <defaults>
</compile_context>

<pallas_src>
import functools

import jax
import jax.numpy as jnp
from jax.experimental import pallas as pl
from jax.experimental.pallas import tpu as pltpu

INPUT_SIZE = 150
HIDDEN = [256, 128, 64, 32]
BN_EPS = 1e-5


def value_net_kernel(x_ref,
                     w1_ref, t1_ref,
                     w2_ref, t2_ref,
                     w3_ref, t3_ref,
                     w4_ref, t4_ref,
                     w5_ref, t5_ref,
                     o_ref):
    """Fused eval-mode forward for one batch tile.

    x_ref : (tile_b, 150) f32  -- raw input, cast to bf16 in VMEM.
    w1..4 : bf16 folded weights, t1..4 : f32 folded (bias+BN) offsets.
    w5    : (1, 32) f32 final weight row, t5 : (1, 1) f32 final bias.
    o_ref : (tile_b, 1) f32    -- lane-packed-enough: 4 B/row writeback.
    """

    def layer(h, w_ref, t_ref):
        z = jnp.dot(h, w_ref[...], preferred_element_type=jnp.float32)
        z = z + t_ref[...]                      # folded Linear bias + BatchNorm (eval)
        return jnp.maximum(z, 0.0).astype(jnp.bfloat16)   # ReLU; Dropout == identity

    h = x_ref[...].astype(jnp.bfloat16)          # (tile_b, 150); K=150 handled by Mosaic
    h = layer(h, w1_ref, t1_ref)                 # -> 256
    h = layer(h, w2_ref, t2_ref)                 # -> 128
    h = layer(h, w3_ref, t3_ref)                 # -> 64
    h = layer(h, w4_ref, t4_ref)                 # -> 32
    # Final 32 -> 1: broadcast-multiply + lane-reduce (VPU/XLU), then bias + tanh
    # on the single real column only.
    z = jnp.sum(h.astype(jnp.float32) * w5_ref[...], axis=-1, keepdims=True)
    z = z + t5_ref[...]
    o_ref[...] = jnp.tanh(z)                     # (tile_b, 1) f32


def init_params(key, input_size=INPUT_SIZE):
    """Deterministic synthetic parameters with the same shapes as the PyTorch module."""
    dims = [input_size] + HIDDEN + [1]
    params = []
    for li in range(5):
        fan_in, fan_out = dims[li], dims[li + 1]
        key, kw, kb = jax.random.split(key, 3)
        bound = 1.0 / jnp.sqrt(fan_in)
        w = jax.random.uniform(kw, (fan_in, fan_out), jnp.float32, -bound, bound)
        b = jax.random.uniform(kb, (1, fan_out), jnp.float32, -bound, bound)
        if li < 4:  # layers followed by BatchNorm1d
            key, kg, kbe, km, kv = jax.random.split(key, 5)
            gamma = 1.0 + 0.1 * jax.random.normal(kg, (1, fan_out), jnp.float32)
            beta = 0.1 * jax.random.normal(kbe, (1, fan_out), jnp.float32)
            rmean = 0.1 * jax.random.normal(km, (1, fan_out), jnp.float32)
            rvar = jax.random.uniform(kv, (1, fan_out), jnp.float32, 0.5, 1.5)
            params.append((w, b, gamma, beta, rmean, rvar))
        else:
            params.append((w, b))
    return params


def fold_params(raw):
    """Fold BN (eval) + bias into the weights, cast the big weights to bf16.

    Layer i<4 : y = relu(h @ (W*scale) + (b*scale + beta - rmean*scale))
    Layer 4   : kept as an f32 (1, 32) row-vector + (1, 1) bias (used in a
                VPU multiply / lane-reduce, not an MXU matmul).
    """
    folded = []
    for li, p in enumerate(raw):
        if li < 4:
            w, b, gamma, beta, rmean, rvar = p
            scale = gamma / jnp.sqrt(rvar + BN_EPS)        # (1, fan_out)
            w_f = (w * scale).astype(jnp.bfloat16)         # column-scaled
            t_f = (b * scale + beta - rmean * scale).astype(jnp.float32)
            folded.append((w_f, t_f))
        else:
            w, b = p                                       # (32, 1), (1, 1)
            folded.append((w.T.astype(jnp.float32),        # (1, 32)
                           b.astype(jnp.float32)))         # (1, 1)
    return folded


@functools.partial(jax.jit, static_argnames=("tile_b",))
def value_network_forward(x, folded, *, tile_b=2048):
    # For v7x throughput runs: tile_b=4096 and batch >= 2*tile_b so the
    # "parallel" grid axis actually spans both TensorCores.
    B, F = x.shape
    assert F == INPUT_SIZE
    # Clamp the tile for small batches; keep it a multiple of 8 (f32 sublanes).
    tile_b = min(tile_b, max(8, pl.cdiv(B, 8) * 8))
    grid = (pl.cdiv(B, tile_b),)   # partial last block handled by Pallas masking

    flat = []
    in_specs = [pl.BlockSpec((tile_b, INPUT_SIZE), lambda i: (i, 0))]  # x: batch-tiled
    for w, t in folded:            # constant block index -> resident, DMA'd once
        flat.append(w)
        in_specs.append(pl.BlockSpec(w.shape, lambda i: (0, 0)))
        flat.append(t)
        in_specs.append(pl.BlockSpec(t.shape, lambda i: (0, 0)))

    out = pl.pallas_call(
        value_net_kernel,
        out_shape=jax.ShapeDtypeStruct((B, 1), jnp.float32),
        grid_spec=pl.GridSpec(
            grid=grid,
            in_specs=in_specs,
            out_specs=pl.BlockSpec((tile_b, 1), lambda i: (i, 0)),
        ),
        compiler_params=pltpu.CompilerParams(
            dimension_semantics=("parallel",),
            vmem_limit_bytes=32 * 1024 * 1024,   # headroom for v5e's 16 MiB default
        ),
    )(x, *flat)
    return out


def reference_forward_folded(x, folded):
    """Pure-JAX reference mimicking the kernel dataflow (bf16 operands, f32 accum)."""
    h = x.astype(jnp.bfloat16)
    for w, t in folded[:4]:
        z = jnp.dot(h.astype(jnp.float32), w.astype(jnp.float32)) + t
        h = jnp.maximum(z, 0.0).astype(jnp.bfloat16)
    w5, t5 = folded[4]
    z = jnp.sum(h.astype(jnp.float32) * w5, axis=-1, keepdims=True) + t5
    return jnp.tanh(z)


def reference_forward_f32(x, raw):
    """Unfolded f32 reference matching the PyTorch module in eval() mode."""
    h = x
    for (w, b, gamma, beta, rmean, rvar) in raw[:4]:
        z = jnp.dot(h, w) + b
        z = (z - rmean) / jnp.sqrt(rvar + BN_EPS) * gamma + beta
        h = jnp.maximum(z, 0.0)
    w, b = raw[4]
    return jnp.tanh(jnp.dot(h, w) + b)


if __name__ == "__main__":
    key = jax.random.PRNGKey(0)
    kx, kp = jax.random.split(key)
    batch = 16
    x = jax.random.normal(kx, (batch, INPUT_SIZE), jnp.float32)

    raw_params = init_params(kp)
    folded = fold_params(raw_params)

    out = value_network_forward(x, folded)
    out = jax.block_until_ready(out)
    assert out.shape == (batch, 1)

    ref_folded = reference_forward_folded(x, folded)
    assert jnp.allclose(out, ref_folded, atol=2e-3, rtol=2e-3), \
        float(jnp.max(jnp.abs(out - ref_folded)))

    # Loose sanity check against the true f32 (PyTorch-eval) math: the bf16
    # weight fold costs ~1e-2-level error on the pre-tanh logit.
    ref_f32 = reference_forward_f32(x, raw_params)
    assert jnp.allclose(out, ref_f32, atol=5e-2), \
        float(jnp.max(jnp.abs(out - ref_f32)))

    print("KERNEL_OK")
</pallas_src>

<mosaic_0001>
module attributes {stable_mosaic.version = 11 : i64} {
  func.func @value_net_kernel(%arg0: i32, %arg1: memref<16x150xf32, #tpu.memory_space<vmem>>, %arg2: memref<150x256xbf16, #tpu.memory_space<vmem>>, %arg3: memref<1x256xf32, #tpu.memory_space<vmem>>, %arg4: memref<256x128xbf16, #tpu.memory_space<vmem>>, %arg5: memref<1x128xf32, #tpu.memory_space<vmem>>, %arg6: memref<128x64xbf16, #tpu.memory_space<vmem>>, %arg7: memref<1x64xf32, #tpu.memory_space<vmem>>, %arg8: memref<64x32xbf16, #tpu.memory_space<vmem>>, %arg9: memref<1x32xf32, #tpu.memory_space<vmem>>, %arg10: memref<1x32xf32, #tpu.memory_space<vmem>>, %arg11: memref<1x1xf32, #tpu.memory_space<vmem>>, %arg12: memref<16x1xf32, #tpu.memory_space<vmem>>) attributes {dimension_semantics = [#tpu.dimension_semantics<parallel>], iteration_bounds = array<i64: 1>, scalar_prefetch = 0 : i64, scratch_operands = 0 : i64, tpu.core_type = #tpu.core_type<tc>, window_params = [{transform_indices = @transform_0, window_bounds = array<i64: 16, 150>}, {pipeline_mode = #tpu.pipeline_mode<synchronous>, transform_indices = @transform_1, window_bounds = array<i64: 150, 256>}, {pipeline_mode = #tpu.pipeline_mode<synchronous>, transform_indices = @transform_2, window_bounds = array<i64: 1, 256>}, {pipeline_mode = #tpu.pipeline_mode<synchronous>, transform_indices = @transform_3, window_bounds = array<i64: 256, 128>}, {pipeline_mode = #tpu.pipeline_mode<synchronous>, transform_indices = @transform_4, window_bounds = array<i64: 1, 128>}, {pipeline_mode = #tpu.pipeline_mode<synchronous>, transform_indices = @transform_5, window_bounds = array<i64: 128, 64>}, {pipeline_mode = #tpu.pipeline_mode<synchronous>, transform_indices = @transform_6, window_bounds = array<i64: 1, 64>}, {pipeline_mode = #tpu.pipeline_mode<synchronous>, transform_indices = @transform_7, window_bounds = array<i64: 64, 32>}, {pipeline_mode = #tpu.pipeline_mode<synchronous>, transform_indices = @transform_8, window_bounds = array<i64: 1, 32>}, {pipeline_mode = #tpu.pipeline_mode<synchronous>, transform_indices = @transform_9, window_bounds = array<i64: 1, 32>}, {pipeline_mode = #tpu.pipeline_mode<synchronous>, transform_indices = @transform_10, window_bounds = array<i64: 1, 1>}, {transform_indices = @transform_11, window_bounds = array<i64: 16, 1>}]} {
    %c0 = arith.constant 0 : index
    %c0_0 = arith.constant 0 : index
    %0 = vector.load %arg1[%c0, %c0_0] : memref<16x150xf32, #tpu.memory_space<vmem>>, vector<16x150xf32>
    %1 = arith.truncf %0 : vector<16x150xf32> to vector<16x150xbf16>
    %c0_1 = arith.constant 0 : index
    %c0_2 = arith.constant 0 : index
    %2 = vector.load %arg2[%c0_1, %c0_2] : memref<150x256xbf16, #tpu.memory_space<vmem>>, vector<150x256xbf16>
    %cst = arith.constant dense<0.000000e+00> : vector<16x256xf32>
    %3 = tpu.matmul %1, %2, %cst {dimension_numbers = #tpu.dot_dimension_numbers<[1], [0], [0], [1], [0, 0, 1, 1], [], []>} : vector<16x150xbf16>, vector<150x256xbf16>, vector<16x256xf32> -> vector<16x256xf32>
    %c0_3 = arith.constant 0 : index
    %c0_4 = arith.constant 0 : index
    %4 = vector.load %arg3[%c0_3, %c0_4] : memref<1x256xf32, #tpu.memory_space<vmem>>, vector<1x256xf32>
    %5 = vector.broadcast %4 : vector<1x256xf32> to vector<16x256xf32>
    %6 = arith.addf %3, %5 : vector<16x256xf32>
    %cst_5 = arith.constant 0.000000e+00 : f32
    %7 = vector.broadcast %cst_5 : f32 to vector<16x256xf32>
    %8 = arith.maximumf %6, %7 : vector<16x256xf32>
    %9 = arith.truncf %8 : vector<16x256xf32> to vector<16x256xbf16>
    %c0_6 = arith.constant 0 : index
    %c0_7 = arith.constant 0 : index
    %10 = vector.load %arg4[%c0_6, %c0_7] : memref<256x128xbf16, #tpu.memory_space<vmem>>, vector<256x128xbf16>
    %cst_8 = arith.constant dense<0.000000e+00> : vector<16x128xf32>
    %11 = tpu.matmul %9, %10, %cst_8 {dimension_numbers = #tpu.dot_dimension_numbers<[1], [0], [0], [1], [0, 0, 1, 1], [], []>} : vector<16x256xbf16>, vector<256x128xbf16>, vector<16x128xf32> -> vector<16x128xf32>
    %c0_9 = arith.constant 0 : index
    %c0_10 = arith.constant 0 : index
    %12 = vector.load %arg5[%c0_9, %c0_10] : memref<1x128xf32, #tpu.memory_space<vmem>>, vector<1x128xf32>
    %13 = vector.broadcast %12 : vector<1x128xf32> to vector<16x128xf32>
    %14 = arith.addf %11, %13 : vector<16x128xf32>
    %cst_11 = arith.constant 0.000000e+00 : f32
    %15 = vector.broadcast %cst_11 : f32 to vector<16x128xf32>
    %16 = arith.maximumf %14, %15 : vector<16x128xf32>
    %17 = arith.truncf %16 : vector<16x128xf32> to vector<16x128xbf16>
    %c0_12 = arith.constant 0 : index
    %c0_13 = arith.constant 0 : index
    %18 = vector.load %arg6[%c0_12, %c0_13] : memref<128x64xbf16, #tpu.memory_space<vmem>>, vector<128x64xbf16>
    %cst_14 = arith.constant dense<0.000000e+00> : vector<16x64xf32>
    %19 = tpu.matmul %17, %18, %cst_14 {dimension_numbers = #tpu.dot_dimension_numbers<[1], [0], [0], [1], [0, 0, 1, 1], [], []>} : vector<16x128xbf16>, vector<128x64xbf16>, vector<16x64xf32> -> vector<16x64xf32>
    %c0_15 = arith.constant 0 : index
    %c0_16 = arith.constant 0 : index
    %20 = vector.load %arg7[%c0_15, %c0_16] : memref<1x64xf32, #tpu.memory_space<vmem>>, vector<1x64xf32>
    %21 = vector.broadcast %20 : vector<1x64xf32> to vector<16x64xf32>
    %22 = arith.addf %19, %21 : vector<16x64xf32>
    %cst_17 = arith.constant 0.000000e+00 : f32
    %23 = vector.broadcast %cst_17 : f32 to vector<16x64xf32>
    %24 = arith.maximumf %22, %23 : vector<16x64xf32>
    %25 = arith.truncf %24 : vector<16x64xf32> to vector<16x64xbf16>
    %c0_18 = arith.constant 0 : index
    %c0_19 = arith.constant 0 : index
    %26 = vector.load %arg8[%c0_18, %c0_19] : memref<64x32xbf16, #tpu.memory_space<vmem>>, vector<64x32xbf16>
    %cst_20 = arith.constant dense<0.000000e+00> : vector<16x32xf32>
    %27 = tpu.matmul %25, %26, %cst_20 {dimension_numbers = #tpu.dot_dimension_numbers<[1], [0], [0], [1], [0, 0, 1, 1], [], []>} : vector<16x64xbf16>, vector<64x32xbf16>, vector<16x32xf32> -> vector<16x32xf32>
    %c0_21 = arith.constant 0 : index
    %c0_22 = arith.constant 0 : index
    %28 = vector.load %arg9[%c0_21, %c0_22] : memref<1x32xf32, #tpu.memory_space<vmem>>, vector<1x32xf32>
    %29 = vector.broadcast %28 : vector<1x32xf32> to vector<16x32xf32>
    %30 = arith.addf %27, %29 : vector<16x32xf32>
    %cst_23 = arith.constant 0.000000e+00 : f32
    %31 = vector.broadcast %cst_23 : f32 to vector<16x32xf32>
    %32 = arith.maximumf %30, %31 : vector<16x32xf32>
    %33 = arith.truncf %32 : vector<16x32xf32> to vector<16x32xbf16>
    %34 = arith.extf %33 : vector<16x32xbf16> to vector<16x32xf32>
    %c0_24 = arith.constant 0 : index
    %c0_25 = arith.constant 0 : index
    %35 = vector.load %arg10[%c0_24, %c0_25] : memref<1x32xf32, #tpu.memory_space<vmem>>, vector<1x32xf32>
    %36 = vector.broadcast %35 : vector<1x32xf32> to vector<16x32xf32>
    %37 = arith.mulf %34, %36 : vector<16x32xf32>
    %cst_26 = arith.constant dense<0.000000e+00> : vector<16xf32>
    %38 = vector.multi_reduction <add>, %37, %cst_26 [1] : vector<16x32xf32> to vector<16xf32>
    %39 = vector.shape_cast %38 : vector<16xf32> to vector<16x1xf32>
    %c0_27 = arith.constant 0 : index
    %c0_28 = arith.constant 0 : index
    %40 = vector.load %arg11[%c0_27, %c0_28] : memref<1x1xf32, #tpu.memory_space<vmem>>, vector<1x1xf32>
    %41 = vector.broadcast %40 : vector<1x1xf32> to vector<16x1xf32>
    %42 = arith.addf %39, %41 : vector<16x1xf32>
    %43 = math.tanh %42 : vector<16x1xf32>
    %c0_29 = arith.constant 0 : index
    %c0_30 = arith.constant 0 : index
    %44 = vector.load %arg12[%c0_29, %c0_30] : memref<16x1xf32, #tpu.memory_space<vmem>>, vector<16x1xf32>
    tpu.vector_store %arg12[%c0_29, %c0_30], %43 {strides = array<i32>} : memref<16x1xf32, #tpu.memory_space<vmem>>, vector<16x1xf32>,
    return
  }
  func.func @transform_0(%arg0: i32) -> (i32, i32) {
    %c0_i32 = arith.constant 0 : i32
    %c0_i32_0 = arith.constant 0 : i32
    return %arg0, %c0_i32 : i32, i32
  }
  func.func @transform_1(%arg0: i32) -> (i32, i32) {
    %c0_i32 = arith.constant 0 : i32
    %c0_i32_0 = arith.constant 0 : i32
    %c0_i32_1 = arith.constant 0 : i32
    return %c0_i32, %c0_i32_0 : i32, i32
  }
  func.func @transform_2(%arg0: i32) -> (i32, i32) {
    %c0_i32 = arith.constant 0 : i32
    %c0_i32_0 = arith.constant 0 : i32
    %c0_i32_1 = arith.constant 0 : i32
    return %c0_i32, %c0_i32_0 : i32, i32
  }
  func.func @transform_3(%arg0: i32) -> (i32, i32) {
    %c0_i32 = arith.constant 0 : i32
    %c0_i32_0 = arith.constant 0 : i32
    %c0_i32_1 = arith.constant 0 : i32
    return %c0_i32, %c0_i32_0 : i32, i32
  }
  func.func @transform_4(%arg0: i32) -> (i32, i32) {
    %c0_i32 = arith.constant 0 : i32
    %c0_i32_0 = arith.constant 0 : i32
    %c0_i32_1 = arith.constant 0 : i32
    return %c0_i32, %c0_i32_0 : i32, i32
  }
  func.func @transform_5(%arg0: i32) -> (i32, i32) {
    %c0_i32 = arith.constant 0 : i32
    %c0_i32_0 = arith.constant 0 : i32
    %c0_i32_1 = arith.constant 0 : i32
    return %c0_i32, %c0_i32_0 : i32, i32
  }
  func.func @transform_6(%arg0: i32) -> (i32, i32) {
    %c0_i32 = arith.constant 0 : i32
    %c0_i32_0 = arith.constant 0 : i32
    %c0_i32_1 = arith.constant 0 : i32
    return %c0_i32, %c0_i32_0 : i32, i32
  }
  func.func @transform_7(%arg0: i32) -> (i32, i32) {
    %c0_i32 = arith.constant 0 : i32
    %c0_i32_0 = arith.constant 0 : i32
    %c0_i32_1 = arith.constant 0 : i32
    return %c0_i32, %c0_i32_0 : i32, i32
  }
  func.func @transform_8(%arg0: i32) -> (i32, i32) {
    %c0_i32 = arith.constant 0 : i32
    %c0_i32_0 = arith.constant 0 : i32
    %c0_i32_1 = arith.constant 0 : i32
    return %c0_i32, %c0_i32_0 : i32, i32
  }
  func.func @transform_9(%arg0: i32) -> (i32, i32) {
    %c0_i32 = arith.constant 0 : i32
    %c0_i32_0 = arith.constant 0 : i32
    %c0_i32_1 = arith.constant 0 : i32
    return %c0_i32, %c0_i32_0 : i32, i32
  }
  func.func @transform_10(%arg0: i32) -> (i32, i32) {
    %c0_i32 = arith.constant 0 : i32
    %c0_i32_0 = arith.constant 0 : i32
    %c0_i32_1 = arith.constant 0 : i32
    return %c0_i32, %c0_i32_0 : i32, i32
  }
  func.func @transform_11(%arg0: i32) -> (i32, i32) {
    %c0_i32 = arith.constant 0 : i32
    %c0_i32_0 = arith.constant 0 : i32
    return %arg0, %c0_i32 : i32, i32
  }
}

</mosaic_0001>

<llo_original>
// kernel: value_network_forward.1
$region0: #{value_network_forward.1}
  #allocation0 [shape = 'u32[]', space=smem, size = 0x4, offset = 0x4, fixed_abs, tag = 'smem constant byte address 0x4 - core index']
  #allocation1 [shape = 'u32[144,128]{1,0:T(1,128)}', space=vmem, size = 0x12000, scoped, tag = 'internal scratch']
  #allocation2 [shape = 'f32[1,1]{1,0:T(1,128)S(1)}', space=vmem, size = 0x200, scoped, tag = 'scoped memory for value_network_forward.1']
  %s0 = inlined_call_operand.hbm [shape: f32[16,150], index: 0, kind: input, shape index: {}]
  %s1 = inlined_call_operand.hbm [shape: bf16[150,256], index: 1, kind: input, shape index: {}]
  %s2 = inlined_call_operand.vmem [shape: f32[1,256], index: 2, kind: input, shape index: {}]
  %s3 = inlined_call_operand.vmem [shape: bf16[256,128], index: 3, kind: input, shape index: {}]
  %s4 = inlined_call_operand.hbm [shape: f32[1,128], index: 4, kind: input, shape index: {}]
  %s5 = inlined_call_operand.vmem [shape: bf16[128,64], index: 5, kind: input, shape index: {}]
  %s6 = inlined_call_operand.vmem [shape: f32[1,64], index: 6, kind: input, shape index: {}]
  %s7 = inlined_call_operand.vmem [shape: bf16[64,32], index: 7, kind: input, shape index: {}]
  %s8 = inlined_call_operand.vmem [shape: f32[1,32], index: 8, kind: input, shape index: {}]
  %s9 = inlined_call_operand.vmem [shape: f32[1,32], index: 9, kind: input, shape index: {}]
  %s10 = inlined_call_operand.<no memory space> [shape: f32[1,1], index: 10, kind: input, shape index: {}]
  %s11 = inlined_call_operand.vmem [shape: f32[16,1], index: 11, kind: output, shape index: {}]
  %s12 = sld [smem:[#allocation0]]
  $region66: #{value_network_forward.1} parent=0
    _
  %s14 = ssub.s32 1, %s12
  %s15 = scalar_select 0, %s14, %s12
  %v16 = vstv %s10
  %17 = vst [vmem:[#allocation2] sm:$0x1] %v16
  $region1: #{value_network_forward.1} parent=0
    #allocation3 [shape = 'u8[16384]{0}', space=vmem, size = 0x4000, scoped, tag = 'input window, operand 0, single buffered']
    #allocation4 [shape = 's32[1]{0}', space=sflag, size = 0x4, scoped, tag = 'scoped memory for value_network_forward.1']
    #allocation5 [shape = 'u8[77824]{0}', space=vmem, size = 0x13000, scoped, tag = 'input window, operand 1, single buffered']
    #allocation6 [shape = 's32[1]{0}', space=sflag, size = 0x4, scoped, tag = 'scoped memory for value_network_forward.1']
    #allocation7 [shape = 'u8[512]{0}', space=vmem, size = 0x400, scoped, tag = 'input window, operand 4, single buffered']
    %18 = vsyncpa [#allocation4], 0
    %19 = vsyncpa [#allocation6], 0
    // Predicated region
    $region2: #{value_network_forward.1} parent=1 // pred_check
      _
    $region3: #{value_network_forward.1} parent=1 // pred_check_branch
      %21 = sbr.rel (0) target = $region5
    $region4: #{value_network_forward.1} parent=1 // pred_region
      %s23 = ssub.s32 512, 512
      %24 = vsyncadd [#allocation4], %s23
      %s25 = sshll.u32 [#allocation3], 4
      %s26 = int_to_ptr.vmem [resolvable:$true] %s25
      %31 = dma.hbm_to_vmem [thread:$0]  %s0, 512, %s26, [#allocation4], 256, 256, 16
    $region5: #{value_network_forward.1} parent=1 // pred_fallthru
      _
    // Predicated region
    $region6: #{value_network_forward.1} parent=1 // pred_check
      _
    $region7: #{value_network_forward.1} parent=1 // pred_check_branch
      %33 = sbr.rel (0) target = $region9
    $region8: #{value_network_forward.1} parent=1 // pred_region
      %s35 = ssub.s32 2432, 2432
      %36 = vsyncadd [#allocation6], %s35
      %s37 = sshll.u32 [#allocation5], 4
      %s38 = int_to_ptr.vmem [resolvable:$true] %s37
      %43 = dma.hbm_to_vmem [thread:$0]  %s1, 2432, %s38, [#allocation6], 128, 128, 8
    $region9: #{value_network_forward.1} parent=1 // pred_fallthru
      _
    // Predicated region
    $region10: #{value_network_forward.1} parent=1 // pred_check
      _
    $region11: #{value_network_forward.1} parent=1 // pred_check_branch
      %45 = sbr.rel (0) target = $region13
    $region12: #{value_network_forward.1} parent=1 // pred_region
      _
    $region13: #{value_network_forward.1} parent=1 // pred_fallthru
      _
    // Predicated region
    $region14: #{value_network_forward.1} parent=1 // pred_check
      _
    $region15: #{value_network_forward.1} parent=1 // pred_check_branch
      %47 = sbr.rel (0) target = $region17
    $region16: #{value_network_forward.1} parent=1 // pred_region
      _
    $region17: #{value_network_forward.1} parent=1 // pred_fallthru
      _
    // Predicated region
    $region18: #{value_network_forward.1} parent=1 // pred_check
      _
    $region19: #{value_network_forward.1} parent=1 // pred_check_branch
      %49 = sbr.rel (0) target = $region21
    $region20: #{value_network_forward.1} parent=1 // pred_region
      %s51 = ssub.s32 16, 16
      %52 = vsyncadd [#allocation6], %s51
      %s54 = sshll.u32 [#allocation7], 4
      %s55 = int_to_ptr.vmem [resolvable:$true] %s54
      %57 = dma.hbm_to_vmem [thread:$0]  %s4, 16, %s55, [#allocation6]
    $region21: #{value_network_forward.1} parent=1 // pred_fallthru
      _
    // Predicated region
    $region22: #{value_network_forward.1} parent=1 // pred_check
      _
    $region23: #{value_network_forward.1} parent=1 // pred_check_branch
      %59 = sbr.rel (0) target = $region25
    $region24: #{value_network_forward.1} parent=1 // pred_region
      _
    $region25: #{value_network_forward.1} parent=1 // pred_fallthru
      _
    // Predicated region
    $region26: #{value_network_forward.1} parent=1 // pred_check
      _
    $region27: #{value_network_forward.1} parent=1 // pred_check_branch
      %61 = sbr.rel (0) target = $region29
    $region28: #{value_network_forward.1} parent=1 // pred_region
      _
    $region29: #{value_network_forward.1} parent=1 // pred_fallthru
      _
    // Predicated region
    $region30: #{value_network_forward.1} parent=1 // pred_check
      _
    $region31: #{value_network_forward.1} parent=1 // pred_check_branch
      %63 = sbr.rel (0) target = $region33
    $region32: #{value_network_forward.1} parent=1 // pred_region
      _
    $region33: #{value_network_forward.1} parent=1 // pred_fallthru
      _
    // Predicated region
    $region34: #{value_network_forward.1} parent=1 // pred_check
      _
    $region35: #{value_network_forward.1} parent=1 // pred_check_branch
      %65 = sbr.rel (0) target = $region37
    $region36: #{value_network_forward.1} parent=1 // pred_region
      _
    $region37: #{value_network_forward.1} parent=1 // pred_fallthru
      _
    // Predicated region
    $region38: #{value_network_forward.1} parent=1 // pred_check
      _
    $region39: #{value_network_forward.1} parent=1 // pred_check_branch
      %67 = sbr.rel (0) target = $region41
    $region40: #{value_network_forward.1} parent=1 // pred_region
      _
    $region41: #{value_network_forward.1} parent=1 // pred_fallthru
      _
    // Predicated region
    $region42: #{value_network_forward.1} parent=1 // pred_check
      _
    $region43: #{value_network_forward.1} parent=1 // pred_check_branch
      %69 = sbr.rel (0) target = $region45
    $region44: #{value_network_forward.1} parent=1 // pred_region
      _
    $region45: #{value_network_forward.1} parent=1 // pred_fallthru
      _
    // Predicated region
    $region46: #{value_network_forward.1} parent=1 // pred_check
      _
    $region47: #{value_network_forward.1} parent=1 // pred_check_branch
      %71 = sbr.rel (0) target = $region49
    $region48: #{value_network_forward.1} parent=1 // pred_region
      %72 = dma.done [#allocation4], 512
    $region49: #{value_network_forward.1} parent=1 // pred_fallthru
      _
    // Predicated region
    $region50: #{value_network_forward.1} parent=1 // pred_check
      _
    $region51: #{value_network_forward.1} parent=1 // pred_check_branch
      %74 = sbr.rel (0) target = $region53
    $region52: #{value_network_forward.1} parent=1 // pred_region
      %75 = dma.done [#allocation6], 2432
    $region53: #{value_network_forward.1} parent=1 // pred_fallthru
      _
    // Predicated region
    $region54: #{value_network_forward.1} parent=1 // pred_check
      _
    $region55: #{value_network_forward.1} parent=1 // pred_check_branch
      %77 = sbr.rel (0) target = $region57
    $region56: #{value_network_forward.1} parent=1 // pred_region
      %78 = dma.done [#allocation6], 16
    $region57: #{value_network_forward.1} parent=1 // pred_fallthru
      _
    %v80 = vld [vmem:[#allocation3] sm:$0xff]
    %v81 = vld [vmem:[#allocation3 + $0x8] sm:$0xff]
    %v82 = vld [vmem:[#allocation3 + $0x10] sm:$0xff]
    %v83 = vld [vmem:[#allocation3 + $0x18] sm:$0xff]
    %v84 = vpack.c.bf16 %v82, %v80
    %v85 = vpack.c.bf16 %v83, %v81
    %v86 = vld [vmem:[#allocation5] sm:$0xff]
    %v87 = vld [vmem:[#allocation5 + $0x8] sm:$0xff]
    %v88 = vld [vmem:[#allocation5 + $0x10] sm:$0xff]
    %v89 = vld [vmem:[#allocation5 + $0x18] sm:$0xff]
    %v90 = vld [vmem:[#allocation5 + $0x20] sm:$0xff]
    %v91 = vld [vmem:[#allocation5 + $0x28] sm:$0xff]
    %v92 = vld [vmem:[#allocation5 + $0x30] sm:$0xff]
    %v93 = vld [vmem:[#allocation5 + $0x38] sm:$0xff]
    %v94 = vld [vmem:[#allocation5 + $0x40] sm:$0xff]
    %v95 = vld [vmem:[#allocation5 + $0x48] sm:$0xff]
    %v96 = vld [vmem:[#allocation5 + $0x50] sm:$0xff]
    %v97 = vld [vmem:[#allocation5 + $0x58] sm:$0xff]
    %v98 = vld [vmem:[#allocation5 + $0x60] sm:$0xff]
    %v99 = vld [vmem:[#allocation5 + $0x68] sm:$0xff]
    %v100 = vld [vmem:[#allocation5 + $0x70] sm:$0xff]
    %v101 = vld [vmem:[#allocation5 + $0x78] sm:$0xff]
    %v102 = vld [vmem:[#allocation5 + $0x80] sm:$0xff]
    %v103 = vld [vmem:[#allocation5 + $0x88] sm:$0xff]
    %v104 = vld [vmem:[#allocation5 + $0x90] sm:$0x77]
    %v105 = vld [vmem:[%s2] sm:$0x3]
    %v107 = vlaneseq
    %v108 = vshrl.u32 %v107, 7
    %v109 = vsub.s32 0, %v108
    %v110 = vrot.slane %v105, %v109
    %v111 = vlaneseq
    %v112 = vshrl.u32 %v111, 7
    %v113 = vsub.s32 1, %v112
    %v114 = vrot.slane %v105, %v113
    %v136 = vunpack.c.l.b16 %v86
    %v137 = vunpack.c.h.b16 %v86
    %v138 = vunpack.c.l.b16 %v87
    %v139 = vunpack.c.h.b16 %v87
    %v140 = vunpack.c.l.b16 %v88
    %v141 = vunpack.c.h.b16 %v88
    %v142 = vunpack.c.l.b16 %v89
    %v143 = vunpack.c.h.b16 %v89
    %v144 = vunpack.c.l.b16 %v90
    %v145 = vunpack.c.h.b16 %v90
    %v146 = vunpack.c.l.b16 %v91
    %v147 = vunpack.c.h.b16 %v91
    %v148 = vunpack.c.l.b16 %v92
    %v149 = vunpack.c.h.b16 %v92
    %v150 = vunpack.c.l.b16 %v93
    %v151 = vunpack.c.h.b16 %v93
    %v152 = vunpack.c.l.b16 %v94
    %v153 = vunpack.c.h.b16 %v94
    %v154 = vunpack.c.l.b16 %v95
    %v155 = vunpack.c.h.b16 %v95
    %v156 = vunpack.c.l.b16 %v96
    %v157 = vunpack.c.h.b16 %v96
    %v158 = vunpack.c.l.b16 %v97
    %v159 = vunpack.c.h.b16 %v97
    %v160 = vunpack.c.l.b16 %v98
    %v161 = vunpack.c.h.b16 %v98
    %v162 = vunpack.c.l.b16 %v99
    %v163 = vunpack.c.h.b16 %v99
    %v164 = vunpack.c.l.b16 %v100
    %v165 = vunpack.c.h.b16 %v100
    %v166 = vunpack.c.l.b16 %v101
    %v167 = vunpack.c.h.b16 %v101
    %v168 = vunpack.c.l.b16 %v102
    %v169 = vunpack.c.h.b16 %v102
    %v170 = vunpack.c.l.b16 %v103
    %v171 = vunpack.c.h.b16 %v103
    %v172 = vunpack.c.l.b16 %v104
    %v173 = vunpack.c.h.b16 %v104
    %v174 = vpack.c.b16 %v138, %v136
    %v175 = vpack.c.b16 %v139, %v137
    %v176 = vpack.c.b16 %v142, %v140
    %v177 = vpack.c.b16 %v143, %v141
    %v178 = vpack.c.b16 %v146, %v144
    %v179 = vpack.c.b16 %v147, %v145
    %v180 = vpack.c.b16 %v150, %v148
    %v181 = vpack.c.b16 %v151, %v149
    %v182 = vpack.c.b16 %v154, %v152
    %v183 = vpack.c.b16 %v155, %v153
    %v184 = vpack.c.b16 %v158, %v156
    %v185 = vpack.c.b16 %v159, %v157
    %v186 = vpack.c.b16 %v162, %v160
    %v187 = vpack.c.b16 %v163, %v161
    %v188 = vpack.c.b16 %v166, %v164
    %v189 = vpack.c.b16 %v167, %v165
    %v190 = vpack.c.b16 %v170, %v168
    %v191 = vpack.c.b16 %v171, %v169
    %v192 = vpack.c.b16 %v172, %v172
    %v193 = vpack.c.b16 %v173, %v173
    %vm212 = vcmask 179200
    %v214 = vsel %vm212, %v85, 0
    %vm216 = vcmask 1042432
    %v218 = vsel %vm216, %v192, 0
    %v221 = vsel %vm216, %v193, 0
    %223 = vmatprep.subr.bf16.mxu0 %v175
    %224 = vmatpush1.bf16.msra.mxu0 %v174
    %225 = vmatprep.subr.bf16.mxu0 %v177
    %226 = vmatpush1.bf16.msra.mxu0 %v176
    %227 = vmatprep.subr.bf16.mxu0 %v179
    %228 = vmatpush1.bf16.msra.mxu0 %v178
    %229 = vmatprep.subr.bf16.mxu0 %v181
    %230 = vmatpush1.bf16.msra.mxu0 %v180
    %231 = vmatprep.subr.bf16.mxu0 %v183
    %232 = vmatpush1.bf16.msra.mxu0 %v182
    %233 = vmatprep.subr.bf16.mxu0 %v185
    %234 = vmatpush1.bf16.msra.mxu0 %v184
    %235 = vmatprep.subr.bf16.mxu0 %v187
    %236 = vmatpush1.bf16.msra.mxu0 %v186
    %237 = vmatprep.subr.bf16.mxu0 %v189
    %238 = vmatpush1.bf16.msra.mxu0 %v188
    %239 = vmatprep.subr.bf16.mxu0 %v191
    %240 = vmatpush1.bf16.msra.mxu0 %v190
    %241 = vmatprep.subr.bf16.mxu0 %v221
    %242 = vmatpush1.bf16.msra.mxu0 %v218
    %243 = vmatprep.subr.bf16.mxu0 0
    %244 = vmatpush1.bf16.msra.mxu0 0
    %245 = vmatprep.subr.bf16.mxu0 0
    %246 = vmatpush1.bf16.msra.mxu0 0
    %247 = vmatprep.subr.bf16.mxu0 0
    %248 = vmatpush1.bf16.msra.mxu0 0
    %249 = vmatprep.subr.bf16.mxu0 0
    %250 = vmatpush1.bf16.msra.mxu0 0
    %251 = vmatprep.subr.bf16.mxu0 0
    %252 = vmatpush1.bf16.msra.mxu0 0
    %253 = vmatprep.subr.bf16.mxu0 0
    %254 = vmatpush1.bf16.msra.mxu0 0
    %255 = vmatprep.mubr.bf16.mxu0 %v214
    %256 = vmatmul.mubr.bf16.gmra.mrb[0].mxu0 %v84
    %v257 = vpop.f32.mrb[0].mxu0
    %v258 = vadd.f32 %v110, %v257
    %v259 = vpop.f32.mrb[0].mxu0
    %v260 = vadd.f32 %v114, %v259
    %v261 = vpop.f32.mrb[0].mxu0
    %v262 = vadd.f32 %v110, %v261
    %v263 = vpop.f32.mrb[0].mxu0
    %v264 = vadd.f32 %v114, %v263
    %265 = vdwg.mxu0
    %v266 = vmax.f32 %v258, 0.0
    %v267 = vmax.f32 %v260, 0.0
    %v268 = vmax.f32 %v262, 0.0
    %v269 = vmax.f32 %v264, 0.0
    %v270 = vpack.c.bf16 %v268, %v266
    %v271 = vpack.c.bf16 %v269, %v267
    %v272 = vld [vmem:[%s3] sm:$0xf]
    %v273 = vld [vmem:[%s3 + $0x4] sm:$0xf]
    %v274 = vld [vmem:[%s3 + $0x8] sm:$0xf]
    %v275 = vld [vmem:[%s3 + $0xc] sm:$0xf]
    %v276 = vld [vmem:[%s3 + $0x10] sm:$0xf]
    %v277 = vld [vmem:[%s3 + $0x14] sm:$0xf]
    %v278 = vld [vmem:[%s3 + $0x18] sm:$0xf]
    %v279 = vld [vmem:[%s3 + $0x1c] sm:$0xf]
    %v280 = vld [vmem:[%s3 + $0x20] sm:$0xf]
    %v281 = vld [vmem:[%s3 + $0x24] sm:$0xf]
    %v282 = vld [vmem:[%s3 + $0x28] sm:$0xf]
    %v283 = vld [vmem:[%s3 + $0x2c] sm:$0xf]
    %v284 = vld [vmem:[%s3 + $0x30] sm:$0xf]
    %v285 = vld [vmem:[%s3 + $0x34] sm:$0xf]
    %v286 = vld [vmem:[%s3 + $0x38] sm:$0xf]
    %v287 = vld [vmem:[%s3 + $0x3c] sm:$0xf]
    %v288 = vld [vmem:[%s3 + $0x40] sm:$0xf]
    %v289 = vld [vmem:[%s3 + $0x44] sm:$0xf]
    %v290 = vld [vmem:[%s3 + $0x48] sm:$0xf]
    %v291 = vld [vmem:[%s3 + $0x4c] sm:$0xf]
    %v292 = vld [vmem:[%s3 + $0x50] sm:$0xf]
    %v293 = vld [vmem:[%s3 + $0x54] sm:$0xf]
    %v294 = vld [vmem:[%s3 + $0x58] sm:$0xf]
    %v295 = vld [vmem:[%s3 + $0x5c] sm:$0xf]
    %v296 = vld [vmem:[%s3 + $0x60] sm:$0xf]
    %v297 = vld [vmem:[%s3 + $0x64] sm:$0xf]
    %v298 = vld [vmem:[%s3 + $0x68] sm:$0xf]
    %v299 = vld [vmem:[%s3 + $0x6c] sm:$0xf]
    %v300 = vld [vmem:[%s3 + $0x70] sm:$0xf]
    %v301 = vld [vmem:[%s3 + $0x74] sm:$0xf]
    %v302 = vld [vmem:[%s3 + $0x78] sm:$0xf]
    %v303 = vld [vmem:[%s3 + $0x7c] sm:$0xf]
    %v304 = vld [vmem:[#allocation7] sm:$0x1]
    %v306 = vlaneseq
    %v307 = vshrl.u32 %v306, 7
    %v308 = vsub.s32 0, %v307
    %v309 = vrot.slane %v304, %v308
    %v343 = vunpack.c.l.b16 %v272
    %v344 = vunpack.c.l.b16 %v273
    %v345 = vunpack.c.l.b16 %v274
    %v346 = vunpack.c.l.b16 %v275
    %v347 = vunpack.c.l.b16 %v276
    %v348 = vunpack.c.l.b16 %v277
    %v349 = vunpack.c.l.b16 %v278
    %v350 = vunpack.c.l.b16 %v279
    %v351 = vunpack.c.l.b16 %v280
    %v352 = vunpack.c.l.b16 %v281
    %v353 = vunpack.c.l.b16 %v282
    %v354 = vunpack.c.l.b16 %v283
    %v355 = vunpack.c.l.b16 %v284
    %v356 = vunpack.c.l.b16 %v285
    %v357 = vunpack.c.l.b16 %v286
    %v358 = vunpack.c.l.b16 %v287
    %v359 = vunpack.c.l.b16 %v288
    %v360 = vunpack.c.l.b16 %v289
    %v361 = vunpack.c.l.b16 %v290
    %v362 = vunpack.c.l.b16 %v291
    %v363 = vunpack.c.l.b16 %v292
    %v364 = vunpack.c.l.b16 %v293
    %v365 = vunpack.c.l.b16 %v294
    %v366 = vunpack.c.l.b16 %v295
    %v367 = vunpack.c.l.b16 %v296
    %v368 = vunpack.c.l.b16 %v297
    %v369 = vunpack.c.l.b16 %v298
    %v370 = vunpack.c.l.b16 %v299
    %v371 = vunpack.c.l.b16 %v300
    %v372 = vunpack.c.l.b16 %v301
    %v373 = vunpack.c.l.b16 %v302
    %v374 = vunpack.c.l.b16 %v303
    %v375 = vpack.c.b16 %v344, %v343
    %v376 = vpack.c.b16 %v346, %v345
    %v377 = vpack.c.b16 %v348, %v347
    %v378 = vpack.c.b16 %v350, %v349
    %v379 = vpack.c.b16 %v352, %v351
    %v380 = vpack.c.b16 %v354, %v353
    %v381 = vpack.c.b16 %v356, %v355
    %v382 = vpack.c.b16 %v358, %v357
    %v383 = vpack.c.b16 %v360, %v359
    %v384 = vpack.c.b16 %v362, %v361
    %v385 = vpack.c.b16 %v364, %v363
    %v386 = vpack.c.b16 %v366, %v365
    %v387 = vpack.c.b16 %v368, %v367
    %v388 = vpack.c.b16 %v370, %v369
    %v389 = vpack.c.b16 %v372, %v371
    %v390 = vpack.c.b16 %v374, %v373
    %407 = vmatprep.subr.bf16.mxu0 0
    %408 = vmatpush1.bf16.msra.mxu0 %v375
    %409 = vmatprep.subr.bf16.mxu0 0
    %410 = vmatpush1.bf16.msra.mxu0 %v376
    %411 = vmatprep.subr.bf16.mxu0 0
    %412 = vmatpush1.bf16.msra.mxu0 %v377
    %413 = vmatprep.subr.bf16.mxu0 0
    %414 = vmatpush1.bf16.msra.mxu0 %v378
    %415 = vmatprep.subr.bf16.mxu0 0
    %416 = vmatpush1.bf16.msra.mxu0 %v379
    %417 = vmatprep.subr.bf16.mxu0 0
    %418 = vmatpush1.bf16.msra.mxu0 %v380
    %419 = vmatprep.subr.bf16.mxu0 0
    %420 = vmatpush1.bf16.msra.mxu0 %v381
    %421 = vmatprep.subr.bf16.mxu0 0
    %422 = vmatpush1.bf16.msra.mxu0 %v382
    %423 = vmatprep.subr.bf16.mxu0 0
    %424 = vmatpush1.bf16.msra.mxu0 %v383
    %425 = vmatprep.subr.bf16.mxu0 0
    %426 = vmatpush1.bf16.msra.mxu0 %v384
    %427 = vmatprep.subr.bf16.mxu0 0
    %428 = vmatpush1.bf16.msra.mxu0 %v385
    %429 = vmatprep.subr.bf16.mxu0 0
    %430 = vmatpush1.bf16.msra.mxu0 %v386
    %431 = vmatprep.subr.bf16.mxu0 0
    %432 = vmatpush1.bf16.msra.mxu0 %v387
    %433 = vmatprep.subr.bf16.mxu0 0
    %434 = vmatpush1.bf16.msra.mxu0 %v388
    %435 = vmatprep.subr.bf16.mxu0 0
    %436 = vmatpush1.bf16.msra.mxu0 %v389
    %437 = vmatprep.subr.bf16.mxu0 0
    %438 = vmatpush1.bf16.msra.mxu0 %v390
    %439 = vmatprep.mubr.bf16.mxu0 %v271
    %440 = vmatmul.mubr.bf16.gmra.mrb[0].mxu0 %v270
    %v441 = vpop.f32.mrb[0].mxu0
    %v442 = vadd.f32 %v309, %v441
    %v443 = vpop.f32.mrb[0].mxu0
    %v444 = vpop.f32.mrb[0].mxu0
    %v445 = vadd.f32 %v309, %v444
    %v446 = vpop.f32.mrb[0].mxu0
    %447 = vdwg.mxu0
    %v448 = vmax.f32 %v442, 0.0
    %v449 = vmax.f32 %v445, 0.0
    %v450 = vpack.c.bf16 %v449, %v448
    %v451 = vld [vmem:[%s5] sm:$0xf]
    %v452 = vld [vmem:[%s5 + $0x4] sm:$0xf]
    %v453 = vld [vmem:[%s5 + $0x8] sm:$0xf]
    %v454 = vld [vmem:[%s5 + $0xc] sm:$0xf]
    %v455 = vld [vmem:[%s5 + $0x10] sm:$0xf]
    %v456 = vld [vmem:[%s5 + $0x14] sm:$0xf]
    %v457 = vld [vmem:[%s5 + $0x18] sm:$0xf]
    %v458 = vld [vmem:[%s5 + $0x1c] sm:$0xf]
    %v459 = vld [vmem:[%s5 + $0x20] sm:$0xf]
    %v460 = vld [vmem:[%s5 + $0x24] sm:$0xf]
    %v461 = vld [vmem:[%s5 + $0x28] sm:$0xf]
    %v462 = vld [vmem:[%s5 + $0x2c] sm:$0xf]
    %v463 = vld [vmem:[%s5 + $0x30] sm:$0xf]
    %v464 = vld [vmem:[%s5 + $0x34] sm:$0xf]
    %v465 = vld [vmem:[%s5 + $0x38] sm:$0xf]
    %v466 = vld [vmem:[%s5 + $0x3c] sm:$0xf]
    %v467 = vld [vmem:[%s6] sm:$0x1]
    %v469 = vlaneseq
    %v470 = vshrl.u32 %v469, 7
    %v471 = vsub.s32 0, %v470
    %v472 = vrot.slane %v467, %v471
    %v490 = vunpack.c.l.b16 %v451
    %v491 = vunpack.c.l.b16 %v452
    %v492 = vunpack.c.l.b16 %v453
    %v493 = vunpack.c.l.b16 %v454
    %v494 = vunpack.c.l.b16 %v455
    %v495 = vunpack.c.l.b16 %v456
    %v496 = vunpack.c.l.b16 %v457
    %v497 = vunpack.c.l.b16 %v458
    %v498 = vunpack.c.l.b16 %v459
    %v499 = vunpack.c.l.b16 %v460
    %v500 = vunpack.c.l.b16 %v461
    %v501 = vunpack.c.l.b16 %v462
    %v502 = vunpack.c.l.b16 %v463
    %v503 = vunpack.c.l.b16 %v464
    %v504 = vunpack.c.l.b16 %v465
    %v505 = vunpack.c.l.b16 %v466
    %v506 = vpack.c.b16 %v491, %v490
    %v507 = vpack.c.b16 %v493, %v492
    %v508 = vpack.c.b16 %v495, %v494
    %v509 = vpack.c.b16 %v497, %v496
    %v510 = vpack.c.b16 %v499, %v498
    %v511 = vpack.c.b16 %v501, %v500
    %v512 = vpack.c.b16 %v503, %v502
    %v513 = vpack.c.b16 %v505, %v504
    %522 = vmatprep.subr.bf16.mxu0 0
    %523 = vmatpush1.bf16.msra.mxu0 %v506
    %524 = vmatprep.subr.bf16.mxu0 0
    %525 = vmatpush1.bf16.msra.mxu0 %v507
    %526 = vmatprep.subr.bf16.mxu0 0
    %527 = vmatpush1.bf16.msra.mxu0 %v508
    %528 = vmatprep.subr.bf16.mxu0 0
    %529 = vmatpush1.bf16.msra.mxu0 %v509
    %530 = vmatprep.subr.bf16.mxu0 0
    %531 = vmatpush1.bf16.msra.mxu0 %v510
    %532 = vmatprep.subr.bf16.mxu0 0
    %533 = vmatpush1.bf16.msra.mxu0 %v511
    %534 = vmatprep.subr.bf16.mxu0 0
    %535 = vmatpush1.bf16.msra.mxu0 %v512
    %536 = vmatprep.subr.bf16.mxu0 0
    %537 = vmatpush1.bf16.msra.mxu0 %v513
    %538 = vmatprep.subr.bf16.mxu0 0
    %539 = vmatpush1.bf16.msra.mxu0 0
    %540 = vmatprep.subr.bf16.mxu0 0
    %541 = vmatpush1.bf16.msra.mxu0 0
    %542 = vmatprep.subr.bf16.mxu0 0
    %543 = vmatpush1.bf16.msra.mxu0 0
    %544 = vmatprep.subr.bf16.mxu0 0
    %545 = vmatpush1.bf16.msra.mxu0 0
    %546 = vmatprep.subr.bf16.mxu0 0
    %547 = vmatpush1.bf16.msra.mxu0 0
    %548 = vmatprep.subr.bf16.mxu0 0
    %549 = vmatpush1.bf16.msra.mxu0 0
    %550 = vmatprep.subr.bf16.mxu0 0
    %551 = vmatpush1.bf16.msra.mxu0 0
    %552 = vmatprep.subr.bf16.mxu0 0
    %553 = vmatpush1.bf16.msra.mxu0 0
    %554 = vmatprep.mubr.bf16.mxu0 0
    %555 = vmatmul.mubr.bf16.gmra.mrb[0].mxu0 %v450
    %v556 = vpop.f32.mrb[0].mxu0
    %v557 = vadd.f32 %v472, %v556
    %v558 = vpop.f32.mrb[0].mxu0
    %v559 = vpop.f32.mrb[0].mxu0
    %v560 = vadd.f32 %v472, %v559
    %v561 = vpop.f32.mrb[0].mxu0
    %562 = vdwg.mxu0
    %v563 = vmax.f32 %v557, 0.0
    %v564 = vmax.f32 %v560, 0.0
    %v565 = vpack.c.bf16 %v564, %v563
    %v566 = vld [vmem:[%s7] sm:$0xf]
    %v567 = vld [vmem:[%s7 + $0x4] sm:$0xf]
    %v568 = vld [vmem:[%s7 + $0x8] sm:$0xf]
    %v569 = vld [vmem:[%s7 + $0xc] sm:$0xf]
    %v570 = vld [vmem:[%s7 + $0x10] sm:$0xf]
    %v571 = vld [vmem:[%s7 + $0x14] sm:$0xf]
    %v572 = vld [vmem:[%s7 + $0x18] sm:$0xf]
    %v573 = vld [vmem:[%s7 + $0x1c] sm:$0xf]
    %v574 = vld [vmem:[%s8] sm:$0x1]
    %v576 = vlaneseq
    %v577 = vshrl.u32 %v576, 7
    %v578 = vsub.s32 0, %v577
    %v579 = vrot.slane %v574, %v578
    %v589 = vunpack.c.l.b16 %v566
    %v590 = vunpack.c.l.b16 %v567
    %v591 = vunpack.c.l.b16 %v568
    %v592 = vunpack.c.l.b16 %v569
    %v593 = vunpack.c.l.b16 %v570
    %v594 = vunpack.c.l.b16 %v571
    %v595 = vunpack.c.l.b16 %v572
    %v596 = vunpack.c.l.b16 %v573
    %v597 = vpack.c.b16 %v590, %v589
    %v598 = vpack.c.b16 %v592, %v591
    %v599 = vpack.c.b16 %v594, %v593
    %v600 = vpack.c.b16 %v596, %v595
    %vm605 = vcmask 523264
    %v607 = vsel %vm605, %v565, 0
    %609 = vmatprep.subr.bf16.mxu0 0
    %610 = vmatpush1.bf16.msra.mxu0 %v597
    %611 = vmatprep.subr.bf16.mxu0 0
    %612 = vmatpush1.bf16.msra.mxu0 %v598
    %613 = vmatprep.subr.bf16.mxu0 0
    %614 = vmatpush1.bf16.msra.mxu0 %v599
    %615 = vmatprep.subr.bf16.mxu0 0
    %616 = vmatpush1.bf16.msra.mxu0 %v600
    %617 = vmatprep.subr.bf16.mxu0 0
    %618 = vmatpush1.bf16.msra.mxu0 0
    %619 = vmatprep.subr.bf16.mxu0 0
    %620 = vmatpush1.bf16.msra.mxu0 0
    %621 = vmatprep.subr.bf16.mxu0 0
    %622 = vmatpush1.bf16.msra.mxu0 0
    %623 = vmatprep.subr.bf16.mxu0 0
    %624 = vmatpush1.bf16.msra.mxu0 0
    %625 = vmatprep.subr.bf16.mxu0 0
    %626 = vmatpush1.bf16.msra.mxu0 0
    %627 = vmatprep.subr.bf16.mxu0 0
    %628 = vmatpush1.bf16.msra.mxu0 0
    %629 = vmatprep.subr.bf16.mxu0 0
    %630 = vmatpush1.bf16.msra.mxu0 0
    %631 = vmatprep.subr.bf16.mxu0 0
    %632 = vmatpush1.bf16.msra.mxu0 0
    %633 = vmatprep.subr.bf16.mxu0 0
    %634 = vmatpush1.bf16.msra.mxu0 0
    %635 = vmatprep.subr.bf16.mxu0 0
    %636 = vmatpush1.bf16.msra.mxu0 0
    %637 = vmatprep.subr.bf16.mxu0 0
    %638 = vmatpush1.bf16.msra.mxu0 0
    %639 = vmatprep.subr.bf16.mxu0 0
    %640 = vmatpush1.bf16.msra.mxu0 0
    %641 = vmatprep.mubr.bf16.mxu0 0
    %642 = vmatmul.mubr.bf16.gmra.mrb[0].mxu0 %v607
    %v643 = vpop.f32.mrb[0].mxu0
    %v644 = vadd.f32 %v579, %v643
    %v645 = vpop.f32.mrb[0].mxu0
    %v646 = vpop.f32.mrb[0].mxu0
    %v647 = vadd.f32 %v579, %v646
    %v648 = vpop.f32.mrb[0].mxu0
    %649 = vdwg.mxu0
    %v650 = vmax.f32 %v644, 0.0
    %v651 = vmax.f32 %v647, 0.0
    %v652 = vpack.c.bf16 %v651, %v650
    %v653 = vunpack.c.l.bf16 %v652
    %v654 = vunpack.c.h.bf16 %v652
    %v655 = vld [vmem:[%s9] sm:$0x1]
    %v657 = vlaneseq
    %v658 = vshrl.u32 %v657, 7
    %v659 = vsub.s32 0, %v658
    %v660 = vrot.slane %v655, %v659
    %v662 = vmul.f32 %v653, %v660
    %v663 = vmul.f32 %v654, %v660
    %vm664 = vcmask 261120
    %v665 = vsel %vm664, %v662, 0.0
    %666 = vadd.xlane.f32.xlu0 %v665
    %v667 = vpop.xlane.xlu0 %666
    %v668 = vsel %vm664, %v663, 0.0
    %669 = vadd.xlane.f32.xlu0 %v668
    %v670 = vpop.xlane.xlu0 %669
    %v671 = vld [vmem:[#allocation2] sm:$0x1]
    %v673 = vlaneseq
    %v674 = vshrl.u32 %v673, 7
    %v675 = vsub.s32 0, %v674
    %v676 = vrot.slane %v671, %v675
    %v678 = vadd.f32 %v667, %v676
    %v679 = vadd.f32 %v670, %v676
    %v680 = vtanh.pop %v678
    %v681 = vtanh.pop %v679
    %vm682 = vcmask 7168
    %683 = vst.msk [vmem:[%s11] sm:$0xff] %vm682, %v680
    %684 = vst.msk [vmem:[%s11 + $0x8] sm:$0xff] %vm682, %v681
    // Predicated region
    $region58: #{value_network_forward.1} parent=1 // pred_check
      _
    $region59: #{value_network_forward.1} parent=1 // pred_check_branch
      %686 = sbr.rel (0) target = $region61
    $region60: #{value_network_forward.1} parent=1 // pred_region
      _
    $region61: #{value_network_forward.1} parent=1 // pred_fallthru
      _
    // Predicated region
    $region62: #{value_network_forward.1} parent=1 // pred_check
      _
    $region63: #{value_network_forward.1} parent=1 // pred_check_branch
      %688 = sbr.rel (0) target = $region65
    $region64: #{value_network_forward.1} parent=1 // pred_region
      _
    $region65: #{value_network_forward.1} parent=1 // pred_fallthru
      _
    %689 = vsyncpa [#allocation4], 1
    %690 = vsyncpa [#allocation6], 1

</llo_original>
